<compile_context>
chip_gen: v5e
topology: v5e:2x2
jax: 0.10.0
libtpu: 0.0.40
codegen_flags: <defaults>
</compile_context>

<pallas_src>
import jax
import jax.numpy as jnp
from jax.experimental import pallas as pl
from jax.experimental.pallas import tpu as pltpu

_LANE = 128


def _round_up(x, m):
    return (x + m - 1) // m * m


def _slab_bytes(rows, cols, itemsize, sub):
    """VMEM bytes of a (rows, cols) slab with lane/sublane padding."""
    return _round_up(max(rows, 1), sub) * _round_up(max(cols, 1), _LANE) * itemsize


def _nconv_kernel(x_ref, a_ref, o_ref):
    # x_ref: (tb, V, L) block of x; a_ref: (V, W), resident; o_ref: (tb, W, L).
    tb, V, L = x_ref.shape
    W = a_ref.shape[1]
    a = a_ref[...]

    if tb == 1:
        # 2-D fast path: out = A^T @ x, written directly in (W, L) layout.
        x2 = x_ref[...].reshape(V, L)
        y = jnp.dot(a.T, x2, preferred_element_type=jnp.float32)          # (W, L)
        o_ref[...] = y.astype(o_ref.dtype).reshape(1, W, L)
    else:
        # Large-row GEMM: rows are (b, l) pairs, so the MXU sees
        # M = tb*L, K = V, N = W.  The tile transposes go to the XLU, which
        # has slack in this HBM-bound kernel.
        xt = jnp.transpose(x_ref[...], (0, 2, 1)).reshape(tb * L, V)      # (tb*L, V)
        y = jnp.dot(xt, a, preferred_element_type=jnp.float32)            # (tb*L, W)
        y = jnp.transpose(y.reshape(tb, L, W), (0, 2, 1))                 # (tb, W, L)
        o_ref[...] = y.astype(o_ref.dtype)


def nconv(x, A, *, compute_dtype=None):
    """einsum('ncvl,vw->ncwl', x, A) with all layout work done in-kernel.

    x: (N, C, V, L), A: (V, W) -> (N, C, W, L).
    Optionally set compute_dtype=jnp.bfloat16 (f32 accumulation is kept).
    """
    N, C, V, L = x.shape
    V2, W = A.shape
    assert V == V2, "contraction dims must match"
    out_dtype = x.dtype
    if compute_dtype is not None:
        x = x.astype(compute_dtype)
        A = A.astype(compute_dtype)
    dtype = x.dtype
    itemsize = jnp.dtype(dtype).itemsize
    sub = 8 if itemsize >= 4 else 32 // itemsize   # sublane packing granularity

    B = N * C
    x3 = x.reshape(B, V, L)                        # free reshape (contiguous merge)

    # --- tile sizing: lane-padded VMEM math, >= 8 grid steps, 32 MiB-safe ---
    # Double-buffered input + output blocks per batch element:
    per_b_io = 2 * (_slab_bytes(V, L, itemsize, sub) + _slab_bytes(W, L, itemsize, sub))
    # In-kernel temporaries: transposed x tile + f32 GEMM result (+ transposed copy).
    per_b_tmp = _slab_bytes(L, V, itemsize, sub) + 2 * _slab_bytes(L, W, 4, 8)
    a_bytes = 2 * _slab_bytes(V, W, itemsize, sub)
    budget = 20 * 1024 * 1024                      # block budget (VMEM limit is 32 MiB)
    tb_cap = max(1, (budget - a_bytes) // (per_b_io + per_b_tmp))

    target_steps = 8                               # keep pipeline fed / both v7x TCs busy
    tb = max(1, min(tb_cap, pl.cdiv(B, target_steps)))
    if tb >= 8:
        tb = (tb // 8) * 8
    tb = max(1, min(tb, B))
    grid = (pl.cdiv(B, tb),)                       # ragged last block handled by Pallas

    flops = 2 * B * L * V * W
    bytes_accessed = itemsize * (B * V * L + V * W + B * W * L)

    out = pl.pallas_call(
        _nconv_kernel,
        out_shape=jax.ShapeDtypeStruct((B, W, L), dtype),
        grid_spec=pltpu.PrefetchScalarGridSpec(
            num_scalar_prefetch=0,
            grid=grid,
            in_specs=[
                # Natural-layout x block; last two dims are the full array dims.
                pl.BlockSpec((tb, V, L), lambda i: (i, 0, 0)),
                # A stays resident across all grid steps.
                pl.BlockSpec((V, W), lambda i: (0, 0)),
            ],
            # Output written directly in (N*C, W, L) layout -- no padding/slice.
            out_specs=pl.BlockSpec((tb, W, L), lambda i: (i, 0, 0)),
        ),
        compiler_params=pltpu.CompilerParams(
            dimension_semantics=("parallel",),       # independent B tiles -> megacore
            vmem_limit_bytes=32 * 1024 * 1024,       # safe on v5e/v6e/v7x
        ),
        cost_estimate=pl.CostEstimate(
            flops=flops, transcendentals=0, bytes_accessed=bytes_accessed
        ),
    )(x3, A)

    return out.reshape(N, C, W, L).astype(out_dtype)   # free reshape back


def nconv_reference(x, A):
    return jnp.einsum('ncvl,vw->ncwl', x, A,
                      precision=jax.lax.Precision.HIGHEST)


if __name__ == "__main__":
    key = jax.random.PRNGKey(0)
    kx, ka = jax.random.split(key)

    # Small shapes consistent with the module: batch=2, channels=4,
    # nodes V=16, seq L=16, A maps V=16 -> W=16.
    N, C, V, L, W = 2, 4, 16, 16, 16
    x = jax.random.normal(kx, (N, C, V, L), dtype=jnp.float32)
    A = jax.random.normal(ka, (V, W), dtype=jnp.float32)

    out = nconv(x, A)
    jax.block_until_ready(out)

    ref = nconv_reference(x, A)
    assert out.shape == (N, C, W, L)
    assert out.dtype == x.dtype
    assert jnp.allclose(out, ref, atol=1e-4, rtol=1e-4), "mismatch vs einsum reference"

    print("KERNEL_OK")
</pallas_src>

<mosaic_0001>
module attributes {stable_mosaic.version = 11 : i64} {
  func.func @_nconv_kernel(%arg0: i32, %arg1: memref<1x16x16xf32, #tpu.memory_space<vmem>>, %arg2: memref<16x16xf32, #tpu.memory_space<vmem>>, %arg3: memref<1x16x16xf32, #tpu.memory_space<vmem>>) attributes {dimension_semantics = [#tpu.dimension_semantics<parallel>], iteration_bounds = array<i64: 8>, scalar_prefetch = 0 : i64, scratch_operands = 0 : i64, tpu.core_type = #tpu.core_type<tc>, window_params = [{transform_indices = @transform_0, window_bounds = array<i64: 1, 16, 16>}, {pipeline_mode = #tpu.pipeline_mode<synchronous>, transform_indices = @transform_1, window_bounds = array<i64: 16, 16>}, {transform_indices = @transform_2, window_bounds = array<i64: 1, 16, 16>}]} {
    %c0 = arith.constant 0 : index
    %c0_0 = arith.constant 0 : index
    %0 = vector.load %arg2[%c0, %c0_0] : memref<16x16xf32, #tpu.memory_space<vmem>>, vector<16x16xf32>
    %c0_1 = arith.constant 0 : index
    %c0_2 = arith.constant 0 : index
    %c0_3 = arith.constant 0 : index
    %1 = vector.load %arg1[%c0_1, %c0_2, %c0_3] : memref<1x16x16xf32, #tpu.memory_space<vmem>>, vector<1x16x16xf32>
    %2 = vector.shape_cast %1 : vector<1x16x16xf32> to vector<16x16xf32>
    %3 = tpu.transpose %0, [1, 0] : vector<16x16xf32> -> vector<16x16xf32>
    %cst = arith.constant dense<0.000000e+00> : vector<16x16xf32>
    %4 = tpu.matmul %3, %2, %cst {dimension_numbers = #tpu.dot_dimension_numbers<[1], [0], [0], [1], [0, 0, 1, 1], [], []>} : vector<16x16xf32>, vector<16x16xf32>, vector<16x16xf32> -> vector<16x16xf32>
    %5 = vector.shape_cast %4 : vector<16x16xf32> to vector<1x16x16xf32>
    %c0_4 = arith.constant 0 : index
    %c0_5 = arith.constant 0 : index
    %c0_6 = arith.constant 0 : index
    %6 = vector.load %arg3[%c0_4, %c0_5, %c0_6] : memref<1x16x16xf32, #tpu.memory_space<vmem>>, vector<1x16x16xf32>
    tpu.vector_store %arg3[%c0_4, %c0_5, %c0_6], %5 {strides = array<i32>} : memref<1x16x16xf32, #tpu.memory_space<vmem>>, vector<1x16x16xf32>,
    return
  }
  func.func @transform_0(%arg0: i32) -> (i32, i32, i32) {
    %c0_i32 = arith.constant 0 : i32
    %c0_i32_0 = arith.constant 0 : i32
    %c0_i32_1 = arith.constant 0 : i32
    return %arg0, %c0_i32, %c0_i32_0 : i32, i32, i32
  }
  func.func @transform_1(%arg0: i32) -> (i32, i32) {
    %c0_i32 = arith.constant 0 : i32
    %c0_i32_0 = arith.constant 0 : i32
    %c0_i32_1 = arith.constant 0 : i32
    return %c0_i32, %c0_i32_0 : i32, i32
  }
  func.func @transform_2(%arg0: i32) -> (i32, i32, i32) {
    %c0_i32 = arith.constant 0 : i32
    %c0_i32_0 = arith.constant 0 : i32
    %c0_i32_1 = arith.constant 0 : i32
    return %arg0, %c0_i32, %c0_i32_0 : i32, i32, i32
  }
}

</mosaic_0001>

<llo_original>
// kernel: tpu_custom_call.1
$region0: #{tpu_custom_call.1}
  #allocation0 [shape = 'u32[]', space=smem, size = 0x4, offset = 0x4, fixed_abs, tag = 'smem constant byte address 0x4 - core index']
  #allocation1 [shape = 'u32[72,128]{1,0:T(1,128)}', space=vmem, size = 0x9000, scoped, tag = 'internal scratch']
  %s0 = inlined_call_operand.hbm [shape: f32[8,16,16], index: 0, kind: input, shape index: {}]
  %s1 = inlined_call_operand.hbm [shape: f32[16,16], index: 1, kind: input, shape index: {}]
  %s2 = inlined_call_operand.hbm [shape: f32[8,16,16], index: 2, kind: output, shape index: {}]
  %s3 = sld [smem:[#allocation0]]
  $region49: #{tpu_custom_call.1} parent=0
    _
  %s5 = ssub.s32 1, %s3
  %s6 = scalar_select 0, %s5, %s3
  $region1: #{tpu_custom_call.1} parent=0
    #allocation2 [shape = 'u8[16384]{0}', space=vmem, size = 0x4000, scoped, tag = 'input window, operand 0']
    #allocation3 [shape = 's32[2]{0}', space=sflag, size = 0x8, scoped, tag = 'scoped memory for tpu_custom_call.1']
    #allocation4 [shape = 's32[2]{0}', space=sflag, size = 0x8, scoped, tag = 'scoped memory for tpu_custom_call.1']
    #allocation5 [shape = 'u8[8192]{0}', space=vmem, size = 0x2000, scoped, tag = 'input window, operand 1, single buffered']
    #allocation6 [shape = 's32[1]{0}', space=sflag, size = 0x4, scoped, tag = 'scoped memory for tpu_custom_call.1']
    #allocation7 [shape = 'u8[16384]{0}', space=vmem, size = 0x4000, scoped, tag = 'output window, operand 0']
    %7 = vsyncpa [#allocation3], 0
    %s8 = scalar_lea.sflag [#allocation3], 1
    %9 = vsyncpa %s8, 0
    %10 = vsyncpa [#allocation6], 0
    %11 = vsyncpa [#allocation4], 0
    %s12 = scalar_lea.sflag [#allocation4], 1
    %13 = vsyncpa %s12, 0
    loop: start=0, step=1, limit=10
    $region2: #{tpu_custom_call.1} parent=1 // loop_pre_header
      _
    $region3: #{tpu_custom_call.1} parent=1 // loop_header
      %s15 = sphi 0, %s19
      %p16 = scmp.ge.s32.totalorder %s15, 10
      %s25 = sphi 0, %s27
      %s28 = sphi 0, %s25
      %s29 = sphi 0, %s28
      %s45 = sphi 0, %s29
      %s49 = sphi 0, %s49
      %s51 = sphi 0, %s49
      %s52 = sphi 0, %s51
      %s66 = sphi 0, %s52
      %s72 = sphi 0, %s74
      %s75 = sphi 0, %s72
      %s76 = sphi 0, %s75
      %s92 = sphi 0, %s76
    $region4: #{tpu_custom_call.1} parent=1 // loop_header_branch
      %18 = sbr.rel (%p16) target = $region8
    $region5: #{tpu_custom_call.1} parent=1 // loop_body
      %s20 = ssub.s32 %s15, 1
      %s21 = ssub.s32 %s15, 2
      %s22 = sadd.s32 %s15, 1
      %s23 = ssub.s32 %s15, %s22
      %p24 = scmp.eq.s32.totalorder %s23, 0
      %s26 = sadd.s32 %s25, 1
      %s27 = scalar_select %p24, %s25, %s26
      %p30 = pneg %p24
      %p31 = scmp.eq.s32.totalorder %s15, 7
      %p32 = por %p30, %p31
      %p33 = scmp.ne.s32.totalorder %s25, %s28
      %p34 = scmp.eq.s32.totalorder %s15, 0
      %p35 = por %p33, %p34
      %p36 = scmp.ne.s32.totalorder %s25, %s28
      %p37 = scmp.eq.s32.totalorder %s20, 7
      %p38 = por %p36, %p37
      %p39 = scmp.ne.s32.totalorder %s28, %s29
      %p40 = scmp.eq.s32.totalorder %s20, 0
      %p41 = por %p39, %p40
      %p42 = scmp.ne.s32.totalorder %s28, %s29
      %p43 = scmp.eq.s32.totalorder %s21, 7
      %p44 = por %p42, %p43
      %p46 = scmp.ne.s32.totalorder %s29, %s45
      %p47 = scmp.eq.s32.totalorder %s21, 0
      %p48 = por %p46, %p47
      %s50 = sadd.s32 %s49, 1
      %p53 = scmp.eq.s32.totalorder %s15, 7
      %p54 = scmp.ne.s32.totalorder %s49, %s51
      %p55 = scmp.eq.s32.totalorder %s15, 0
      %p56 = por %p54, %p55
      %p57 = scmp.ne.s32.totalorder %s49, %s51
      %p58 = scmp.eq.s32.totalorder %s20, 7
      %p59 = por %p57, %p58
      %p60 = scmp.ne.s32.totalorder %s51, %s52
      %p61 = scmp.eq.s32.totalorder %s20, 0
      %p62 = por %p60, %p61
      %p63 = scmp.ne.s32.totalorder %s51, %s52
      %p64 = scmp.eq.s32.totalorder %s21, 7
      %p65 = por %p63, %p64
      %p67 = scmp.ne.s32.totalorder %s52, %s66
      %p68 = scmp.eq.s32.totalorder %s21, 0
      %p69 = por %p67, %p68
      %s70 = ssub.s32 %s15, %s22
      %p71 = scmp.eq.s32.totalorder %s70, 0
      %s73 = sadd.s32 %s72, 1
      %s74 = scalar_select %p71, %s72, %s73
      %p77 = pneg %p71
      %p78 = scmp.eq.s32.totalorder %s15, 7
      %p79 = por %p77, %p78
      %p80 = scmp.ne.s32.totalorder %s72, %s75
      %p81 = scmp.eq.s32.totalorder %s15, 0
      %p82 = por %p80, %p81
      %p83 = scmp.ne.s32.totalorder %s72, %s75
      %p84 = scmp.eq.s32.totalorder %s20, 7
      %p85 = por %p83, %p84
      %p86 = scmp.ne.s32.totalorder %s75, %s76
      %p87 = scmp.eq.s32.totalorder %s20, 0
      %p88 = por %p86, %p87
      %p89 = scmp.ne.s32.totalorder %s75, %s76
      %p90 = scmp.eq.s32.totalorder %s21, 7
      %p91 = por %p89, %p90
      %p93 = scmp.ne.s32.totalorder %s76, %s92
      %p94 = scmp.eq.s32.totalorder %s21, 0
      %p95 = por %p93, %p94
      %p96 = scmp.le.s32.totalorder 1, %s15
      %p97 = scmp.lt.s32.totalorder %s15, 9
      %p98 = pnand %p96, %p97
      %p99 = pneg %p98
      // Predicated region
      $region9: #{tpu_custom_call.1} parent=5 // pred_check
        _
      $region10: #{tpu_custom_call.1} parent=5 // pred_check_branch
        %101 = sbr.rel (%p98) target = $region12
      $region11: #{tpu_custom_call.1} parent=5 // pred_region
        %s102 = ssub.s32 %s15, 1
        // Predicated region
        $region13: #{tpu_custom_call.1} parent=11 // pred_check
          %p103 = pneg %p62
        $region14: #{tpu_custom_call.1} parent=11 // pred_check_branch
          %105 = sbr.rel (%p103) target = $region16
        $region15: #{tpu_custom_call.1} parent=11 // pred_region
          %107 = vsyncadd [#allocation6], 0
          %s108 = sshll.u32 %s1, 4
          %s109 = int_to_ptr.hbm [resolvable:$true] %s108
          %s110 = sshll.u32 [#allocation5], 4
          %s111 = int_to_ptr.vmem [resolvable:$true] %s110
          %116 = dma.hbm_to_vmem [thread:$0]  %s109, 256, %s111, [#allocation6], 128, 128, 8
        $region16: #{tpu_custom_call.1} parent=11 // pred_fallthru
          _
      $region12: #{tpu_custom_call.1} parent=5 // pred_fallthru
        _
      %p117 = scmp.lt.s32.totalorder %s15, 8
      // Predicated region
      $region17: #{tpu_custom_call.1} parent=5 // pred_check
        %p118 = pneg %p117
      $region18: #{tpu_custom_call.1} parent=5 // pred_check_branch
        %120 = sbr.rel (%p118) target = $region20
      $region19: #{tpu_custom_call.1} parent=5 // pred_region
        // Predicated region
        $region21: #{tpu_custom_call.1} parent=19 // pred_check
          %p121 = pneg %p35
        $region22: #{tpu_custom_call.1} parent=19 // pred_check_branch
          %123 = sbr.rel (%p121) target = $region24
        $region23: #{tpu_custom_call.1} parent=19 // pred_region
          %s124 = sand.u32 %s25, 1
          %s125 = scalar_lea.sflag [#allocation3], %s124
          %s126 = sand.u32 %s25, 1
          %s127 = smul.addr %s126, 16
          %s128 = scalar_lea.vmem [#allocation2], %s127
          %130 = vsyncadd %s125, 0
          %s131 = smul.addr %s15, 2
          %s132 = smul.addr %s131, 8
          %s133 = scalar_lea.hbm %s0, %s132
          %s134 = sshll.u32 %s133, 4
          %s135 = int_to_ptr.hbm [resolvable:$true] %s134
          %s136 = sshll.u32 %s128, 4
          %s137 = int_to_ptr.vmem [resolvable:$true] %s136
          %142 = dma.hbm_to_vmem [thread:$0]  %s135, 256, %s137, %s125, 128, 128, 8
        $region24: #{tpu_custom_call.1} parent=19 // pred_fallthru
          _
      $region20: #{tpu_custom_call.1} parent=5 // pred_fallthru
        _
      %p143 = scmp.le.s32.totalorder 1, %s15
      %p144 = scmp.lt.s32.totalorder %s15, 9
      %p145 = pnand %p143, %p144
      %p146 = pneg %p145
      // Predicated region
      $region25: #{tpu_custom_call.1} parent=5 // pred_check
        _
      $region26: #{tpu_custom_call.1} parent=5 // pred_check_branch
        %148 = sbr.rel (%p145) target = $region28
      $region27: #{tpu_custom_call.1} parent=5 // pred_region
        %s149 = ssub.s32 %s15, 1
        %s150 = sand.u32 %s28, 1
        %s151 = scalar_lea.sflag [#allocation3], %s150
        %s152 = sand.u32 %s28, 1
        %s153 = smul.addr %s152, 16
        %s154 = scalar_lea.vmem [#allocation2], %s153
        // Predicated region
        $region29: #{tpu_custom_call.1} parent=27 // pred_check
          %p155 = pneg %p41
        $region30: #{tpu_custom_call.1} parent=27 // pred_check_branch
          %157 = sbr.rel (%p155) target = $region32
        $region31: #{tpu_custom_call.1} parent=27 // pred_region
          %159 = dma.done %s151, 256
        $region32: #{tpu_custom_call.1} parent=27 // pred_fallthru
          _
        // Predicated region
        $region33: #{tpu_custom_call.1} parent=27 // pred_check
          %p160 = pneg %p62
        $region34: #{tpu_custom_call.1} parent=27 // pred_check_branch
          %162 = sbr.rel (%p160) target = $region36
        $region35: #{tpu_custom_call.1} parent=27 // pred_region
          %164 = dma.done [#allocation6], 256
        $region36: #{tpu_custom_call.1} parent=27 // pred_fallthru
          _
        %s165 = sand.u32 %s28, 1
        %s166 = scalar_lea.sflag [#allocation3], %s165
        %s167 = sand.u32 %s28, 1
        %s168 = smul.addr %s167, 16
        %s169 = scalar_lea.vmem [#allocation2], %s168
        %p170 = pneg %p41
        %p171 = pneg %p38
        %p172 = pneg %p62
        %p173 = pneg %p59
        %p174 = pneg %p88
        %p175 = pneg %p85
        %s176 = sand.u32 %s75, 1
        %s177 = scalar_lea.sflag [#allocation4], %s176
        %s178 = sand.u32 %s75, 1
        %s179 = smul.addr %s178, 16
        %s180 = scalar_lea.vmem [#allocation7], %s179
        %v181 = vld [vmem:[#allocation5] sm:$0xff]
        %v182 = vld [vmem:[#allocation5 + $0x8] sm:$0xff]
        %v183 = vld [vmem:[%s154] sm:$0xff]
        %v184 = vld [vmem:[%s154 + $0x8] sm:$0xff]
        %185 = vxpose.xlu0.b32.start [1/16] %v181, 128
        %186 = vxpose.xlu0.b32.cont [2/16] %v182, 128
        %187 = vxpose.xlu0.b32.cont [3/16] 0.0, 128
        %188 = vxpose.xlu0.b32.cont [4/16] 0.0, 128
        %189 = vxpose.xlu0.b32.cont [5/16] 0.0, 128
        %190 = vxpose.xlu0.b32.cont [6/16] 0.0, 128
        %191 = vxpose.xlu0.b32.cont [7/16] 0.0, 128
        %192 = vxpose.xlu0.b32.cont [8/16] 0.0, 128
        %193 = vxpose.xlu0.b32.cont [9/16] 0.0, 128
        %194 = vxpose.xlu0.b32.cont [10/16] 0.0, 128
        %195 = vxpose.xlu0.b32.cont [11/16] 0.0, 128
        %196 = vxpose.xlu0.b32.cont [12/16] 0.0, 128
        %197 = vxpose.xlu0.b32.cont [13/16] 0.0, 128
        %198 = vxpose.xlu0.b32.cont [14/16] 0.0, 128
        %199 = vxpose.xlu0.b32.cont [15/16] 0.0, 128
        %200 = vxpose.xlu0.b32.end [16/16] 0.0, 128
        %v201 = vpop.trf.xlu0
        %v202 = vpop.trf.xlu0
        %v203 = vpop.trf.xlu0
        %v204 = vpop.trf.xlu0
        %v205 = vpop.trf.xlu0
        %v206 = vpop.trf.xlu0
        %v207 = vpop.trf.xlu0
        %v208 = vpop.trf.xlu0
        %v209 = vpop.trf.xlu0
        %v210 = vpop.trf.xlu0
        %v211 = vpop.trf.xlu0
        %v212 = vpop.trf.xlu0
        %v213 = vpop.trf.xlu0
        %v214 = vpop.trf.xlu0
        %v215 = vpop.trf.xlu0
        %v216 = vpop.trf.xlu0
        %vm217 = vcmask 130048
        %v219 = vsel %vm217, %v201, 0
        %v222 = vsel %vm217, %v202, 0
        %224 = vmatpush.msra.mxu0 0.0
        %225 = vmatpush.msra.mxu0 0.0
        %226 = vmatpush.msra.mxu0 0.0
        %227 = vmatpush.msra.mxu0 0.0
        %228 = vmatpush.msra.mxu0 0.0
        %229 = vmatpush.msra.mxu0 0.0
        %230 = vmatpush.msra.mxu0 0.0
        %231 = vmatpush.msra.mxu0 0.0
        %232 = vmatpush.msra.mxu0 0.0
        %233 = vmatpush.msra.mxu0 0.0
        %234 = vmatpush.msra.mxu0 0.0
        %235 = vmatpush.msra.mxu0 0.0
        %236 = vmatpush.msra.mxu0 0.0
        %237 = vmatpush.msra.mxu0 0.0
        %238 = vmatpush.msra.mxu0 %v184
        %239 = vmatpush.msra.mxu0 %v183
        %240 = vmatmul.f32.gmra.mxu0 %v219
        %v241 = vpop.f32.mrf.mxu0
        %v242 = vadd.f32 0.0, %v241
        %243 = vmatmul.f32.gmra.mxu0 %v222
        %v244 = vpop.f32.mrf.mxu0
        %v245 = vadd.f32 0.0, %v244
        %246 = vdwg.mxu0
        %247 = vst.msk [vmem:[%s180] sm:$0xff] %vm217, %v242
        %248 = vst.msk [vmem:[%s180 + $0x8] sm:$0xff] %vm217, %v245
        %s249 = sand.u32 %s75, 1
        %s250 = scalar_lea.sflag [#allocation4], %s249
        %s251 = sand.u32 %s75, 1
        %s252 = smul.addr %s251, 16
        %s253 = scalar_lea.vmem [#allocation7], %s252
        // Predicated region
        $region37: #{tpu_custom_call.1} parent=27 // pred_check
          %p254 = pneg %p85
        $region38: #{tpu_custom_call.1} parent=27 // pred_check_branch
          %256 = sbr.rel (%p254) target = $region40
        $region39: #{tpu_custom_call.1} parent=27 // pred_region
          %258 = vsyncadd %s250, 0
          %s259 = smul.addr %s20, 2
          %s260 = smul.addr %s259, 8
          %s261 = scalar_lea.hbm %s2, %s260
          %s262 = sshll.u32 %s253, 4
          %s263 = int_to_ptr.vmem [resolvable:$true] %s262
          %s264 = sshll.u32 %s261, 4
          %s265 = int_to_ptr.hbm [resolvable:$true] %s264
          %270 = dma.vmem_to_hbm [thread:$0]  %s263, 256, %s265, %s250, 128, 128, 8
        $region40: #{tpu_custom_call.1} parent=27 // pred_fallthru
          _
      $region28: #{tpu_custom_call.1} parent=5 // pred_fallthru
        _
      %p271 = scmp.le.s32.totalorder 2, %s15
      // Predicated region
      $region41: #{tpu_custom_call.1} parent=5 // pred_check
        %p272 = pneg %p271
      $region42: #{tpu_custom_call.1} parent=5 // pred_check_branch
        %274 = sbr.rel (%p272) target = $region44
      $region43: #{tpu_custom_call.1} parent=5 // pred_region
        %s275 = ssub.s32 %s15, 2
        // Predicated region
        $region45: #{tpu_custom_call.1} parent=43 // pred_check
          %p276 = pneg %p91
        $region46: #{tpu_custom_call.1} parent=43 // pred_check_branch
          %278 = sbr.rel (%p276) target = $region48
        $region47: #{tpu_custom_call.1} parent=43 // pred_region
          %s279 = sand.u32 %s76, 1
          %s280 = scalar_lea.sflag [#allocation4], %s279
          %s281 = sand.u32 %s76, 1
          %s282 = smul.addr %s281, 16
          %s283 = scalar_lea.vmem [#allocation7], %s282
          %285 = dma.done %s280, 256
        $region48: #{tpu_custom_call.1} parent=43 // pred_fallthru
          _
      $region44: #{tpu_custom_call.1} parent=5 // pred_fallthru
        _
    $region6: #{tpu_custom_call.1} parent=1 // loop_footer
      %s19 = sadd.s32 1, %s15
    $region7: #{tpu_custom_call.1} parent=1 // loop_footer_branch
      %14 = sbr.rel target = $region3
    $region8: #{tpu_custom_call.1} parent=1 // loop_exit
      _
    %286 = vsyncpa [#allocation3], 1
    %s287 = scalar_lea.sflag [#allocation3], 1
    %288 = vsyncpa %s287, 1
    %289 = vsyncpa [#allocation6], 1
    %290 = vsyncpa [#allocation4], 1
    %s291 = scalar_lea.sflag [#allocation4], 1
    %292 = vsyncpa %s291, 1

</llo_original>
